<compile_context>
chip_gen: v5e
topology: v5e:2x2
jax: 0.10.0
libtpu: 0.0.40
codegen_flags: <defaults>
</compile_context>

<pallas_src>
import numpy as np
import jax
import jax.numpy as jnp
from jax.experimental import pallas as pl
from jax.experimental.pallas import tpu as pltpu

# ---- module hyperparameters (consistent with the PyTorch module defaults) ----
UNITS = 32
THETAS_DIM = 3
NUM_BLOCK_LAYERS = 4
BACKCAST_LEN = 10
FORECAST_LEN = 5
BATCH = 16            # 2 batch tiles -> exercises the parallel grid axis

PAD = 128             # lane padding for every feature axis
NW = 5                # stacked weight slabs: w0(+b0), w1(+b1), w2(+b2), w3(+b3), wt@basis
CARRIER = PAD - 1     # lane that carries the constant 1.0 used to fold b1..b3


def _linspace_centered(backcast_length: int, forecast_length: int):
    norm = max(backcast_length, forecast_length)
    start = -backcast_length
    stop = forecast_length - 1
    lin_space = np.linspace(
        start / norm, stop / norm, backcast_length + forecast_length, dtype=np.float32
    )
    return lin_space[:backcast_length], lin_space[backcast_length:]


# ----------------------------- Pallas kernel --------------------------------
def nbeats_trend_kernel(x_ref, w_ref, back_ref, fore_ref, xpad_ref):
    # x_ref   : (tile_b, BACKCAST_LEN)  raw input rows
    # w_ref   : (NW, PAD, PAD) packed weights (biases + basis folded in)
    # back_ref: (tile_b, BACKCAST_LEN)  output
    # fore_ref: (tile_b, FORECAST_LEN)  output
    # xpad_ref: (tile_b, PAD) VMEM scratch for the lane-padded augmented input
    tile_b = xpad_ref.shape[0]

    # Build the padded input tile in VMEM: zeros everywhere except a 1.0 at the
    # bias lane (lane BACKCAST_LEN), then overwrite lanes [0:10) with x.
    lane = jax.lax.broadcasted_iota(jnp.int32, (tile_b, PAD), 1)
    xpad_ref[...] = (lane == BACKCAST_LEN).astype(jnp.float32)
    xpad_ref[:, :BACKCAST_LEN] = x_ref[...]
    x = xpad_ref[...]

    # fc stack: Linear+ReLU x4 (dropout = identity in eval mode).
    # Biases are folded into the matmuls; lane CARRIER stays at 1.0 through the
    # stack (ReLU(1)=1) and carries b1..b3 into the next layer.
    h = jnp.maximum(jnp.dot(x, w_ref[0], preferred_element_type=jnp.float32), 0.0)
    h = jnp.maximum(jnp.dot(h, w_ref[1], preferred_element_type=jnp.float32), 0.0)
    h = jnp.maximum(jnp.dot(h, w_ref[2], preferred_element_type=jnp.float32), 0.0)
    h = jnp.maximum(jnp.dot(h, w_ref[3], preferred_element_type=jnp.float32), 0.0)

    # fused shared-theta projection + polynomial basis: one matmul,
    # lanes [0:10) = backcast, lanes [10:15) = forecast.
    out = jnp.dot(h, w_ref[4], preferred_element_type=jnp.float32)
    back_ref[...] = out[:, :BACKCAST_LEN]
    fore_ref[...] = out[:, BACKCAST_LEN:BACKCAST_LEN + FORECAST_LEN]


# ------------------ one-time parameter packing (hoisted) ---------------------
def prepare_params(params):
    """Pack raw params into a single weight stack [NW, PAD, PAD] (done once)."""
    (w0, b0, w1, b1, w2, b2, w3, b3, wt, tb, tf) = params

    w_stack = np.zeros((NW, PAD, PAD), np.float32)

    # layer 0: Linear(backcast_len -> units); b0 folded via the '1' lane of the
    # padded input; that same lane also seeds the carrier-1 at output lane 127.
    w_stack[0, :BACKCAST_LEN, :UNITS] = w0
    w_stack[0, BACKCAST_LEN, :UNITS] = b0
    w_stack[0, BACKCAST_LEN, CARRIER] = 1.0

    # layers 1..3: Linear(units -> units); bias in the carrier row, and the
    # carrier lane is propagated with an identity entry.
    for k, (w, b) in enumerate(((w1, b1), (w2, b2), (w3, b3)), start=1):
        w_stack[k, :UNITS, :UNITS] = w
        w_stack[k, CARRIER, :UNITS] = b
        w_stack[k, CARRIER, CARRIER] = 1.0

    # fused shared-theta + basis:  wt @ [T_backcast | T_forecast]  -> (UNITS, 15)
    # (floating-point re-association vs. the reference; checked within 1e-5)
    basis = np.concatenate([tb, tf], axis=1)                 # (THETAS_DIM, 15)
    w_stack[4, :UNITS, :BACKCAST_LEN + FORECAST_LEN] = wt @ basis
    # carrier row of the last slab is zero -> the carrier lane never leaks out.

    return jnp.asarray(w_stack)


def _choose_tile_b(batch: int) -> int:
    """Largest sublane-multiple tile that keeps grid >= 2 (both v7x cores busy);
    capped at 512 rows. Falls back to a single tile for tiny batches."""
    for t in (512, 256, 128, 64, 32, 16, 8):
        if t <= batch // 2 and batch % t == 0:
            return t
    return batch


# ------------------------------- forward -------------------------------------
@jax.jit
def nbeats_trend_forward(x, w_stack):
    """x: [B, BACKCAST_LEN] f32. Returns (backcast [B,10], forecast [B,5])."""
    B = x.shape[0]
    tile_b = _choose_tile_b(B)
    assert B % tile_b == 0
    grid = (B // tile_b,)

    flops = 2 * B * (BACKCAST_LEN * UNITS
                     + (NUM_BLOCK_LAYERS - 1) * UNITS * UNITS
                     + UNITS * (BACKCAST_LEN + FORECAST_LEN))
    bytes_accessed = (x.size + w_stack.size + B * (BACKCAST_LEN + FORECAST_LEN)) * 4

    backcast, forecast = pl.pallas_call(
        nbeats_trend_kernel,
        out_shape=(
            jax.ShapeDtypeStruct((B, BACKCAST_LEN), jnp.float32),
            jax.ShapeDtypeStruct((B, FORECAST_LEN), jnp.float32),
        ),
        grid_spec=pltpu.PrefetchScalarGridSpec(
            num_scalar_prefetch=0,
            grid=grid,
            in_specs=[
                # x tile at its natural width (last dim == full array dim is legal)
                pl.BlockSpec((tile_b, BACKCAST_LEN), lambda i: (i, 0)),
                # packed weights: constant index_map -> resident across steps
                pl.BlockSpec((NW, PAD, PAD), lambda i: (0, 0, 0)),
            ],
            out_specs=[
                pl.BlockSpec((tile_b, BACKCAST_LEN), lambda i: (i, 0)),
                pl.BlockSpec((tile_b, FORECAST_LEN), lambda i: (i, 0)),
            ],
            scratch_shapes=[pltpu.VMEM((tile_b, PAD), jnp.float32)],
        ),
        compiler_params=pltpu.CompilerParams(
            dimension_semantics=("parallel",)),
        cost_estimate=pl.CostEstimate(
            flops=flops, transcendentals=0, bytes_accessed=bytes_accessed),
    )(x, w_stack)

    return backcast, forecast


# --------------------- deterministic parameter construction ------------------
def make_params(key):
    ks = jax.random.split(key, 9)

    def w_init(k, shape):
        return np.asarray(jax.random.normal(k, shape, jnp.float32)) * 0.1

    # weights stored already transposed to [in, out] so the kernel does x @ W + b
    w0 = w_init(ks[0], (BACKCAST_LEN, UNITS))
    b0 = w_init(ks[1], (UNITS,)).reshape(-1)
    w1 = w_init(ks[2], (UNITS, UNITS))
    b1 = w_init(ks[3], (UNITS,)).reshape(-1)
    w2 = w_init(ks[4], (UNITS, UNITS))
    b2 = w_init(ks[5], (UNITS,)).reshape(-1)
    w3 = w_init(ks[6], (UNITS, UNITS))
    b3 = w_init(ks[7], (UNITS,)).reshape(-1)
    wt = w_init(ks[8], (UNITS, THETAS_DIM))  # shared theta weight, no bias

    # fixed polynomial-basis buffers (exactly as in the PyTorch module)
    b_ls, f_ls = _linspace_centered(BACKCAST_LEN, FORECAST_LEN)
    norm = np.sqrt(FORECAST_LEN / THETAS_DIM)
    powers = np.arange(THETAS_DIM)[:, None]
    tb = (b_ls[None, :] ** powers).astype(np.float32) * norm  # [thetas_dim, backcast]
    tf = (f_ls[None, :] ** powers).astype(np.float32) * norm  # [thetas_dim, forecast]

    return (w0, b0, w1, b1, w2, b2, w3, b3, wt, tb, tf)


def reference_forward(x, params):
    """Pure-JAX reference, matching the PyTorch module op-for-op (unfused)."""
    (w0, b0, w1, b1, w2, b2, w3, b3, wt, tb, tf) = [jnp.asarray(p) for p in params]
    h = jnp.maximum(x @ w0 + b0, 0.0)
    h = jnp.maximum(h @ w1 + b1, 0.0)   # Dropout is identity in eval mode
    h = jnp.maximum(h @ w2 + b2, 0.0)
    h = jnp.maximum(h @ w3 + b3, 0.0)
    theta = h @ wt                       # shared theta_b_fc == theta_f_fc
    return theta @ tb, theta @ tf


if __name__ == "__main__":
    key = jax.random.PRNGKey(0)
    k_params, k_x = jax.random.split(key)

    params = make_params(k_params)
    # one-time packing/padding, hoisted out of the per-call path
    w_stack = prepare_params(params)

    x = jax.random.normal(k_x, (BATCH, BACKCAST_LEN), jnp.float32)

    backcast, forecast = nbeats_trend_forward(x, w_stack)
    jax.block_until_ready((backcast, forecast))

    ref_back, ref_fore = reference_forward(x, params)
    assert backcast.shape == (BATCH, BACKCAST_LEN)
    assert forecast.shape == (BATCH, FORECAST_LEN)
    np.testing.assert_allclose(np.asarray(backcast), np.asarray(ref_back),
                               rtol=1e-5, atol=1e-5)
    np.testing.assert_allclose(np.asarray(forecast), np.asarray(ref_fore),
                               rtol=1e-5, atol=1e-5)

    print("KERNEL_OK")
</pallas_src>

<mosaic_0001>
module attributes {stable_mosaic.version = 11 : i64} {
  func.func @nbeats_trend_kernel(%arg0: i32, %arg1: memref<8x10xf32, #tpu.memory_space<vmem>>, %arg2: memref<5x128x128xf32, #tpu.memory_space<vmem>>, %arg3: memref<8x10xf32, #tpu.memory_space<vmem>>, %arg4: memref<8x5xf32, #tpu.memory_space<vmem>>, %arg5: memref<8x128xf32, #tpu.memory_space<vmem>>) attributes {dimension_semantics = [#tpu.dimension_semantics<parallel>], iteration_bounds = array<i64: 2>, scalar_prefetch = 0 : i64, scratch_operands = 1 : i64, tpu.core_type = #tpu.core_type<tc>, window_params = [{transform_indices = @transform_0, window_bounds = array<i64: 8, 10>}, {pipeline_mode = #tpu.pipeline_mode<synchronous>, transform_indices = @transform_1, window_bounds = array<i64: 5, 128, 128>}, {transform_indices = @transform_2, window_bounds = array<i64: 8, 10>}, {transform_indices = @transform_3, window_bounds = array<i64: 8, 5>}]} {
    %0 = tpu.iota {dimensions = array<i32: 1>} : vector<8x128xi32>
    %c10_i32 = arith.constant 10 : i32
    %1 = vector.broadcast %c10_i32 : i32 to vector<8x128xi32>
    %2 = arith.cmpi eq, %0, %1 : vector<8x128xi32>
    %3 = arith.extui %2 : vector<8x128xi1> to vector<8x128xi32>
    %4 = arith.sitofp %3 : vector<8x128xi32> to vector<8x128xf32>
    %c0 = arith.constant 0 : index
    %c0_0 = arith.constant 0 : index
    %5 = vector.load %arg5[%c0, %c0_0] : memref<8x128xf32, #tpu.memory_space<vmem>>, vector<8x128xf32>
    tpu.vector_store %arg5[%c0, %c0_0], %4 {strides = array<i32>} : memref<8x128xf32, #tpu.memory_space<vmem>>, vector<8x128xf32>,
    %c0_1 = arith.constant 0 : index
    %c0_2 = arith.constant 0 : index
    %6 = vector.load %arg1[%c0_1, %c0_2] : memref<8x10xf32, #tpu.memory_space<vmem>>, vector<8x10xf32>
    %c0_3 = arith.constant 0 : index
    %c0_4 = arith.constant 0 : index
    %7 = vector.load %arg5[%c0_3, %c0_4] : memref<8x128xf32, #tpu.memory_space<vmem>>, vector<8x10xf32>
    tpu.vector_store %arg5[%c0_3, %c0_4], %6 {strides = array<i32>} : memref<8x128xf32, #tpu.memory_space<vmem>>, vector<8x10xf32>,
    %c0_5 = arith.constant 0 : index
    %c0_6 = arith.constant 0 : index
    %8 = vector.load %arg5[%c0_5, %c0_6] : memref<8x128xf32, #tpu.memory_space<vmem>>, vector<8x128xf32>
    %c0_7 = arith.constant 0 : index
    %c0_8 = arith.constant 0 : index
    %c0_9 = arith.constant 0 : index
    %9 = vector.load %arg2[%c0_7, %c0_8, %c0_9] : memref<5x128x128xf32, #tpu.memory_space<vmem>>, vector<1x128x128xf32>
    %10 = vector.shape_cast %9 : vector<1x128x128xf32> to vector<128x128xf32>
    %cst = arith.constant dense<0.000000e+00> : vector<8x128xf32>
    %11 = tpu.matmul %8, %10, %cst {dimension_numbers = #tpu.dot_dimension_numbers<[1], [0], [0], [1], [0, 0, 1, 1], [], []>} : vector<8x128xf32>, vector<128x128xf32>, vector<8x128xf32> -> vector<8x128xf32>
    %cst_10 = arith.constant 0.000000e+00 : f32
    %12 = vector.broadcast %cst_10 : f32 to vector<8x128xf32>
    %13 = arith.maximumf %11, %12 : vector<8x128xf32>
    %c1 = arith.constant 1 : index
    %c0_11 = arith.constant 0 : index
    %c0_12 = arith.constant 0 : index
    %14 = vector.load %arg2[%c1, %c0_11, %c0_12] : memref<5x128x128xf32, #tpu.memory_space<vmem>>, vector<1x128x128xf32>
    %15 = vector.shape_cast %14 : vector<1x128x128xf32> to vector<128x128xf32>
    %cst_13 = arith.constant dense<0.000000e+00> : vector<8x128xf32>
    %16 = tpu.matmul %13, %15, %cst_13 {dimension_numbers = #tpu.dot_dimension_numbers<[1], [0], [0], [1], [0, 0, 1, 1], [], []>} : vector<8x128xf32>, vector<128x128xf32>, vector<8x128xf32> -> vector<8x128xf32>
    %cst_14 = arith.constant 0.000000e+00 : f32
    %17 = vector.broadcast %cst_14 : f32 to vector<8x128xf32>
    %18 = arith.maximumf %16, %17 : vector<8x128xf32>
    %c2 = arith.constant 2 : index
    %c0_15 = arith.constant 0 : index
    %c0_16 = arith.constant 0 : index
    %19 = vector.load %arg2[%c2, %c0_15, %c0_16] : memref<5x128x128xf32, #tpu.memory_space<vmem>>, vector<1x128x128xf32>
    %20 = vector.shape_cast %19 : vector<1x128x128xf32> to vector<128x128xf32>
    %cst_17 = arith.constant dense<0.000000e+00> : vector<8x128xf32>
    %21 = tpu.matmul %18, %20, %cst_17 {dimension_numbers = #tpu.dot_dimension_numbers<[1], [0], [0], [1], [0, 0, 1, 1], [], []>} : vector<8x128xf32>, vector<128x128xf32>, vector<8x128xf32> -> vector<8x128xf32>
    %cst_18 = arith.constant 0.000000e+00 : f32
    %22 = vector.broadcast %cst_18 : f32 to vector<8x128xf32>
    %23 = arith.maximumf %21, %22 : vector<8x128xf32>
    %c3 = arith.constant 3 : index
    %c0_19 = arith.constant 0 : index
    %c0_20 = arith.constant 0 : index
    %24 = vector.load %arg2[%c3, %c0_19, %c0_20] : memref<5x128x128xf32, #tpu.memory_space<vmem>>, vector<1x128x128xf32>
    %25 = vector.shape_cast %24 : vector<1x128x128xf32> to vector<128x128xf32>
    %cst_21 = arith.constant dense<0.000000e+00> : vector<8x128xf32>
    %26 = tpu.matmul %23, %25, %cst_21 {dimension_numbers = #tpu.dot_dimension_numbers<[1], [0], [0], [1], [0, 0, 1, 1], [], []>} : vector<8x128xf32>, vector<128x128xf32>, vector<8x128xf32> -> vector<8x128xf32>
    %cst_22 = arith.constant 0.000000e+00 : f32
    %27 = vector.broadcast %cst_22 : f32 to vector<8x128xf32>
    %28 = arith.maximumf %26, %27 : vector<8x128xf32>
    %c4 = arith.constant 4 : index
    %c0_23 = arith.constant 0 : index
    %c0_24 = arith.constant 0 : index
    %29 = vector.load %arg2[%c4, %c0_23, %c0_24] : memref<5x128x128xf32, #tpu.memory_space<vmem>>, vector<1x128x128xf32>
    %30 = vector.shape_cast %29 : vector<1x128x128xf32> to vector<128x128xf32>
    %cst_25 = arith.constant dense<0.000000e+00> : vector<8x128xf32>
    %31 = tpu.matmul %28, %30, %cst_25 {dimension_numbers = #tpu.dot_dimension_numbers<[1], [0], [0], [1], [0, 0, 1, 1], [], []>} : vector<8x128xf32>, vector<128x128xf32>, vector<8x128xf32> -> vector<8x128xf32>
    %32 = vector.extract_strided_slice %31 {offsets = [0, 0], sizes = [8, 10], strides = [1, 1]} : vector<8x128xf32> to vector<8x10xf32>
    %c0_26 = arith.constant 0 : index
    %c0_27 = arith.constant 0 : index
    %33 = vector.load %arg3[%c0_26, %c0_27] : memref<8x10xf32, #tpu.memory_space<vmem>>, vector<8x10xf32>
    tpu.vector_store %arg3[%c0_26, %c0_27], %32 {strides = array<i32>} : memref<8x10xf32, #tpu.memory_space<vmem>>, vector<8x10xf32>,
    %34 = vector.extract_strided_slice %31 {offsets = [0, 10], sizes = [8, 5], strides = [1, 1]} : vector<8x128xf32> to vector<8x5xf32>
    %c0_28 = arith.constant 0 : index
    %c0_29 = arith.constant 0 : index
    %35 = vector.load %arg4[%c0_28, %c0_29] : memref<8x5xf32, #tpu.memory_space<vmem>>, vector<8x5xf32>
    tpu.vector_store %arg4[%c0_28, %c0_29], %34 {strides = array<i32>} : memref<8x5xf32, #tpu.memory_space<vmem>>, vector<8x5xf32>,
    return
  }
  func.func @transform_0(%arg0: i32) -> (i32, i32) {
    %c0_i32 = arith.constant 0 : i32
    %c0_i32_0 = arith.constant 0 : i32
    return %arg0, %c0_i32 : i32, i32
  }
  func.func @transform_1(%arg0: i32) -> (i32, i32, i32) {
    %c0_i32 = arith.constant 0 : i32
    %c0_i32_0 = arith.constant 0 : i32
    %c0_i32_1 = arith.constant 0 : i32
    %c0_i32_2 = arith.constant 0 : i32
    return %c0_i32, %c0_i32_0, %c0_i32_1 : i32, i32, i32
  }
  func.func @transform_2(%arg0: i32) -> (i32, i32) {
    %c0_i32 = arith.constant 0 : i32
    %c0_i32_0 = arith.constant 0 : i32
    return %arg0, %c0_i32 : i32, i32
  }
  func.func @transform_3(%arg0: i32) -> (i32, i32) {
    %c0_i32 = arith.constant 0 : i32
    %c0_i32_0 = arith.constant 0 : i32
    return %arg0, %c0_i32 : i32, i32
  }
}

</mosaic_0001>

<llo_original>
// kernel: nbeats_trend_forward.1
$region0: #{nbeats_trend_forward.1}
  #allocation0 [shape = 'u32[]', space=smem, size = 0x4, offset = 0x4, fixed_abs, tag = 'smem constant byte address 0x4 - core index']
  #allocation1 [shape = 'u32[72,128]{1,0:T(1,128)}', space=vmem, size = 0x9000, scoped, tag = 'internal scratch']
  #allocation2 [shape = 'f32[8,128]{1,0:T(8,128)}', space=vmem, size = 0x1000, scoped, tag = 'scratch operand']
  %s0 = inlined_call_operand.hbm [shape: f32[16,10], index: 0, kind: input, shape index: {}]
  %s1 = inlined_call_operand.hbm [shape: f32[5,128,128], index: 1, kind: input, shape index: {}]
  %s2 = inlined_call_operand.hbm [shape: f32[16,10], index: 2, kind: output, shape index: {0}]
  %s3 = inlined_call_operand.vmem [shape: f32[16,5], index: 3, kind: output, shape index: {1}]
  %4 = xla_tuple %s2, %s3
  %s5 = sld [smem:[#allocation0]]
  $region57: #{nbeats_trend_forward.1} parent=0
    _
  %s7 = ssub.s32 1, %s5
  %s8 = scalar_select 0, %s7, %s5
  $region1: #{nbeats_trend_forward.1} parent=0
    #allocation3 [shape = 'u8[8192]{0}', space=vmem, size = 0x2000, scoped, tag = 'input window, operand 0']
    #allocation4 [shape = 's32[2]{0}', space=sflag, size = 0x8, scoped, tag = 'scoped memory for nbeats_trend_forward.1']
    #allocation5 [shape = 's32[2]{0}', space=sflag, size = 0x8, scoped, tag = 'scoped memory for nbeats_trend_forward.1']
    #allocation6 [shape = 'u8[327680]{0}', space=vmem, size = 0x50000, scoped, tag = 'input window, operand 1, single buffered']
    #allocation7 [shape = 's32[1]{0}', space=sflag, size = 0x4, scoped, tag = 'scoped memory for nbeats_trend_forward.1']
    #allocation8 [shape = 'u8[8192]{0}', space=vmem, size = 0x2000, scoped, tag = 'output window, operand 0']
    %9 = vsyncpa [#allocation4], 0
    %s10 = scalar_lea.sflag [#allocation4], 1
    %11 = vsyncpa %s10, 0
    %12 = vsyncpa [#allocation7], 0
    %13 = vsyncpa [#allocation5], 0
    %s14 = scalar_lea.sflag [#allocation5], 1
    %15 = vsyncpa %s14, 0
    loop: start=0, step=1, limit=4
    $region2: #{nbeats_trend_forward.1} parent=1 // loop_pre_header
      _
    $region3: #{nbeats_trend_forward.1} parent=1 // loop_header
      %s17 = sphi 0, %s21
      %p18 = scmp.ge.s32.totalorder %s17, 4
      %s27 = sphi 0, %s29
      %s30 = sphi 0, %s27
      %s31 = sphi 0, %s30
      %s47 = sphi 0, %s31
      %s51 = sphi 0, %s51
      %s53 = sphi 0, %s51
      %s54 = sphi 0, %s53
      %s68 = sphi 0, %s54
      %s74 = sphi 0, %s76
      %s77 = sphi 0, %s74
      %s78 = sphi 0, %s77
      %s94 = sphi 0, %s78
      %s100 = sphi 0, %s102
      %s103 = sphi 0, %s100
      %s104 = sphi 0, %s103
      %s120 = sphi 0, %s104
    $region4: #{nbeats_trend_forward.1} parent=1 // loop_header_branch
      %20 = sbr.rel (%p18) target = $region8
    $region5: #{nbeats_trend_forward.1} parent=1 // loop_body
      %s22 = ssub.s32 %s17, 1
      %s23 = ssub.s32 %s17, 2
      %s24 = sadd.s32 %s17, 1
      %s25 = ssub.s32 %s17, %s24
      %p26 = scmp.eq.s32.totalorder %s25, 0
      %s28 = sadd.s32 %s27, 1
      %s29 = scalar_select %p26, %s27, %s28
      %p32 = pneg %p26
      %p33 = scmp.eq.s32.totalorder %s17, 1
      %p34 = por %p32, %p33
      %p35 = scmp.ne.s32.totalorder %s27, %s30
      %p36 = scmp.eq.s32.totalorder %s17, 0
      %p37 = por %p35, %p36
      %p38 = scmp.ne.s32.totalorder %s27, %s30
      %p39 = scmp.eq.s32.totalorder %s22, 1
      %p40 = por %p38, %p39
      %p41 = scmp.ne.s32.totalorder %s30, %s31
      %p42 = scmp.eq.s32.totalorder %s22, 0
      %p43 = por %p41, %p42
      %p44 = scmp.ne.s32.totalorder %s30, %s31
      %p45 = scmp.eq.s32.totalorder %s23, 1
      %p46 = por %p44, %p45
      %p48 = scmp.ne.s32.totalorder %s31, %s47
      %p49 = scmp.eq.s32.totalorder %s23, 0
      %p50 = por %p48, %p49
      %s52 = sadd.s32 %s51, 1
      %p55 = scmp.eq.s32.totalorder %s17, 1
      %p56 = scmp.ne.s32.totalorder %s51, %s53
      %p57 = scmp.eq.s32.totalorder %s17, 0
      %p58 = por %p56, %p57
      %p59 = scmp.ne.s32.totalorder %s51, %s53
      %p60 = scmp.eq.s32.totalorder %s22, 1
      %p61 = por %p59, %p60
      %p62 = scmp.ne.s32.totalorder %s53, %s54
      %p63 = scmp.eq.s32.totalorder %s22, 0
      %p64 = por %p62, %p63
      %p65 = scmp.ne.s32.totalorder %s53, %s54
      %p66 = scmp.eq.s32.totalorder %s23, 1
      %p67 = por %p65, %p66
      %p69 = scmp.ne.s32.totalorder %s54, %s68
      %p70 = scmp.eq.s32.totalorder %s23, 0
      %p71 = por %p69, %p70
      %s72 = ssub.s32 %s17, %s24
      %p73 = scmp.eq.s32.totalorder %s72, 0
      %s75 = sadd.s32 %s74, 1
      %s76 = scalar_select %p73, %s74, %s75
      %p79 = pneg %p73
      %p80 = scmp.eq.s32.totalorder %s17, 1
      %p81 = por %p79, %p80
      %p82 = scmp.ne.s32.totalorder %s74, %s77
      %p83 = scmp.eq.s32.totalorder %s17, 0
      %p84 = por %p82, %p83
      %p85 = scmp.ne.s32.totalorder %s74, %s77
      %p86 = scmp.eq.s32.totalorder %s22, 1
      %p87 = por %p85, %p86
      %p88 = scmp.ne.s32.totalorder %s77, %s78
      %p89 = scmp.eq.s32.totalorder %s22, 0
      %p90 = por %p88, %p89
      %p91 = scmp.ne.s32.totalorder %s77, %s78
      %p92 = scmp.eq.s32.totalorder %s23, 1
      %p93 = por %p91, %p92
      %p95 = scmp.ne.s32.totalorder %s78, %s94
      %p96 = scmp.eq.s32.totalorder %s23, 0
      %p97 = por %p95, %p96
      %s98 = ssub.s32 %s17, %s24
      %p99 = scmp.eq.s32.totalorder %s98, 0
      %s101 = sadd.s32 %s100, 1
      %s102 = scalar_select %p99, %s100, %s101
      %p105 = pneg %p99
      %p106 = scmp.eq.s32.totalorder %s17, 1
      %p107 = por %p105, %p106
      %p108 = scmp.ne.s32.totalorder %s100, %s103
      %p109 = scmp.eq.s32.totalorder %s17, 0
      %p110 = por %p108, %p109
      %p111 = scmp.ne.s32.totalorder %s100, %s103
      %p112 = scmp.eq.s32.totalorder %s22, 1
      %p113 = por %p111, %p112
      %p114 = scmp.ne.s32.totalorder %s103, %s104
      %p115 = scmp.eq.s32.totalorder %s22, 0
      %p116 = por %p114, %p115
      %p117 = scmp.ne.s32.totalorder %s103, %s104
      %p118 = scmp.eq.s32.totalorder %s23, 1
      %p119 = por %p117, %p118
      %p121 = scmp.ne.s32.totalorder %s104, %s120
      %p122 = scmp.eq.s32.totalorder %s23, 0
      %p123 = por %p121, %p122
      %p124 = scmp.le.s32.totalorder 1, %s17
      %p125 = scmp.lt.s32.totalorder %s17, 3
      %p126 = pnand %p124, %p125
      %p127 = pneg %p126
      // Predicated region
      $region9: #{nbeats_trend_forward.1} parent=5 // pred_check
        _
      $region10: #{nbeats_trend_forward.1} parent=5 // pred_check_branch
        %129 = sbr.rel (%p126) target = $region12
      $region11: #{nbeats_trend_forward.1} parent=5 // pred_region
        %s130 = ssub.s32 %s17, 1
        // Predicated region
        $region13: #{nbeats_trend_forward.1} parent=11 // pred_check
          %p131 = pneg %p64
        $region14: #{nbeats_trend_forward.1} parent=11 // pred_check_branch
          %133 = sbr.rel (%p131) target = $region16
        $region15: #{nbeats_trend_forward.1} parent=11 // pred_region
          %135 = vsyncadd [#allocation7], 0
          %s136 = sshll.u32 %s1, 4
          %s137 = int_to_ptr.hbm [resolvable:$true] %s136
          %s138 = sshll.u32 [#allocation6], 4
          %s139 = int_to_ptr.vmem [resolvable:$true] %s138
          %144 = dma.hbm_to_vmem [thread:$0]  %s137, 10240, %s139, [#allocation7], 128, 128, 8
        $region16: #{nbeats_trend_forward.1} parent=11 // pred_fallthru
          _
      $region12: #{nbeats_trend_forward.1} parent=5 // pred_fallthru
        _
      %p145 = scmp.lt.s32.totalorder %s17, 2
      // Predicated region
      $region17: #{nbeats_trend_forward.1} parent=5 // pred_check
        %p146 = pneg %p145
      $region18: #{nbeats_trend_forward.1} parent=5 // pred_check_branch
        %148 = sbr.rel (%p146) target = $region20
      $region19: #{nbeats_trend_forward.1} parent=5 // pred_region
        // Predicated region
        $region21: #{nbeats_trend_forward.1} parent=19 // pred_check
          %p149 = pneg %p37
        $region22: #{nbeats_trend_forward.1} parent=19 // pred_check_branch
          %151 = sbr.rel (%p149) target = $region24
        $region23: #{nbeats_trend_forward.1} parent=19 // pred_region
          %s152 = sand.u32 %s27, 1
          %s153 = scalar_lea.sflag [#allocation4], %s152
          %s154 = sand.u32 %s27, 1
          %s155 = smul.addr %s154, 8
          %s156 = scalar_lea.vmem [#allocation3], %s155
          %158 = vsyncadd %s153, 0
          %s159 = smul.addr %s17, 8
          %s160 = scalar_lea.hbm %s0, %s159
          %s162 = sshll.u32 %s160, 4
          %s163 = int_to_ptr.hbm [resolvable:$true] %s162
          %s164 = sshll.u32 %s156, 4
          %s165 = int_to_ptr.vmem [resolvable:$true] %s164
          %167 = dma.hbm_to_vmem [thread:$0]  %s163, 128, %s165, %s153
        $region24: #{nbeats_trend_forward.1} parent=19 // pred_fallthru
          _
      $region20: #{nbeats_trend_forward.1} parent=5 // pred_fallthru
        _
      %p168 = scmp.le.s32.totalorder 1, %s17
      %p169 = scmp.lt.s32.totalorder %s17, 3
      %p170 = pnand %p168, %p169
      %p171 = pneg %p170
      // Predicated region
      $region25: #{nbeats_trend_forward.1} parent=5 // pred_check
        _
      $region26: #{nbeats_trend_forward.1} parent=5 // pred_check_branch
        %173 = sbr.rel (%p170) target = $region28
      $region27: #{nbeats_trend_forward.1} parent=5 // pred_region
        %s174 = ssub.s32 %s17, 1
        %s175 = sand.u32 %s30, 1
        %s176 = scalar_lea.sflag [#allocation4], %s175
        %s177 = sand.u32 %s30, 1
        %s178 = smul.addr %s177, 8
        %s179 = scalar_lea.vmem [#allocation3], %s178
        // Predicated region
        $region29: #{nbeats_trend_forward.1} parent=27 // pred_check
          %p180 = pneg %p43
        $region30: #{nbeats_trend_forward.1} parent=27 // pred_check_branch
          %182 = sbr.rel (%p180) target = $region32
        $region31: #{nbeats_trend_forward.1} parent=27 // pred_region
          %184 = dma.done %s176, 128
        $region32: #{nbeats_trend_forward.1} parent=27 // pred_fallthru
          _
        // Predicated region
        $region33: #{nbeats_trend_forward.1} parent=27 // pred_check
          %p185 = pneg %p64
        $region34: #{nbeats_trend_forward.1} parent=27 // pred_check_branch
          %187 = sbr.rel (%p185) target = $region36
        $region35: #{nbeats_trend_forward.1} parent=27 // pred_region
          %189 = dma.done [#allocation7], 10240
        $region36: #{nbeats_trend_forward.1} parent=27 // pred_fallthru
          _
        %s190 = sand.u32 %s30, 1
        %s191 = scalar_lea.sflag [#allocation4], %s190
        %s192 = sand.u32 %s30, 1
        %s193 = smul.addr %s192, 8
        %s194 = scalar_lea.vmem [#allocation3], %s193
        %p195 = pneg %p43
        %p196 = pneg %p40
        %p197 = pneg %p64
        %p198 = pneg %p61
        %p199 = pneg %p90
        %p200 = pneg %p87
        %s201 = sand.u32 %s77, 1
        %s202 = scalar_lea.sflag [#allocation5], %s201
        %s203 = sand.u32 %s77, 1
        %s204 = smul.addr %s203, 8
        %s205 = scalar_lea.vmem [#allocation8], %s204
        %p206 = pneg %p116
        %p207 = pneg %p113
        %p208 = scmp.lt.s32.totalorder %s22, 1
        %s209 = scalar_select %p208, %s22, 1
        %s210 = smul.addr %s209, 8
        %s211 = scalar_lea.vmem %s3, %s210
        %p212 = scmp.lt.s32.totalorder %s22, 1
        %s213 = scalar_select %p212, %s22, 1
        %s214 = smul.addr %s213, 8
        %s215 = scalar_lea.vmem %s3, %s214
        %v216 = vlaneseq
        %v217 = vand.u32 %v216, 127
        %vm218 = vcmp.eq.s32.totalorder %v217, 10
        %v219 = vsel %vm218, 1, 0
        %v220 = vcvt.s32.f32 %v219
        %221 = vst [vmem:[#allocation2] sm:$0xff] %v220
        %v222 = vld [vmem:[%s179] sm:$0xff]
        %vm223 = vcmask 80896
        %224 = vst.msk [vmem:[#allocation2] sm:$0xff] %vm223, %v222
        %v225 = vld [vmem:[#allocation2] sm:$0xff]
        %v226 = vld [vmem:[#allocation6] sm:$0xff]
        %v227 = vld [vmem:[#allocation6 + $0x8] sm:$0xff]
        %v228 = vld [vmem:[#allocation6 + $0x10] sm:$0xff]
        %v229 = vld [vmem:[#allocation6 + $0x18] sm:$0xff]
        %v230 = vld [vmem:[#allocation6 + $0x20] sm:$0xff]
        %v231 = vld [vmem:[#allocation6 + $0x28] sm:$0xff]
        %v232 = vld [vmem:[#allocation6 + $0x30] sm:$0xff]
        %v233 = vld [vmem:[#allocation6 + $0x38] sm:$0xff]
        %v234 = vld [vmem:[#allocation6 + $0x40] sm:$0xff]
        %v235 = vld [vmem:[#allocation6 + $0x48] sm:$0xff]
        %v236 = vld [vmem:[#allocation6 + $0x50] sm:$0xff]
        %v237 = vld [vmem:[#allocation6 + $0x58] sm:$0xff]
        %v238 = vld [vmem:[#allocation6 + $0x60] sm:$0xff]
        %v239 = vld [vmem:[#allocation6 + $0x68] sm:$0xff]
        %v240 = vld [vmem:[#allocation6 + $0x70] sm:$0xff]
        %v241 = vld [vmem:[#allocation6 + $0x78] sm:$0xff]
        %242 = vmatpush.msra.mxu0 %v241
        %243 = vmatpush.msra.mxu0 %v240
        %244 = vmatpush.msra.mxu0 %v239
        %245 = vmatpush.msra.mxu0 %v238
        %246 = vmatpush.msra.mxu0 %v237
        %247 = vmatpush.msra.mxu0 %v236
        %248 = vmatpush.msra.mxu0 %v235
        %249 = vmatpush.msra.mxu0 %v234
        %250 = vmatpush.msra.mxu0 %v233
        %251 = vmatpush.msra.mxu0 %v232
        %252 = vmatpush.msra.mxu0 %v231
        %253 = vmatpush.msra.mxu0 %v230
        %254 = vmatpush.msra.mxu0 %v229
        %255 = vmatpush.msra.mxu0 %v228
        %256 = vmatpush.msra.mxu0 %v227
        %257 = vmatpush.msra.mxu0 %v226
        %258 = vmatmul.f32.gmra.mxu0 %v225
        %v259 = vpop.f32.mrf.mxu0
        %v260 = vadd.f32 0.0, %v259
        %261 = vdwg.mxu0
        %v262 = vmax.f32 %v260, 0.0
        %s263 = scalar_lea.vmem [#allocation6], 128
        %v264 = vld [vmem:[%s263] sm:$0xff]
        %v265 = vld [vmem:[%s263 + $0x8] sm:$0xff]
        %v266 = vld [vmem:[%s263 + $0x10] sm:$0xff]
        %v267 = vld [vmem:[%s263 + $0x18] sm:$0xff]
        %v268 = vld [vmem:[%s263 + $0x20] sm:$0xff]
        %v269 = vld [vmem:[%s263 + $0x28] sm:$0xff]
        %v270 = vld [vmem:[%s263 + $0x30] sm:$0xff]
        %v271 = vld [vmem:[%s263 + $0x38] sm:$0xff]
        %v272 = vld [vmem:[%s263 + $0x40] sm:$0xff]
        %v273 = vld [vmem:[%s263 + $0x48] sm:$0xff]
        %v274 = vld [vmem:[%s263 + $0x50] sm:$0xff]
        %v275 = vld [vmem:[%s263 + $0x58] sm:$0xff]
        %v276 = vld [vmem:[%s263 + $0x60] sm:$0xff]
        %v277 = vld [vmem:[%s263 + $0x68] sm:$0xff]
        %v278 = vld [vmem:[%s263 + $0x70] sm:$0xff]
        %v279 = vld [vmem:[%s263 + $0x78] sm:$0xff]
        %280 = vmatpush.msra.mxu0 %v279
        %281 = vmatpush.msra.mxu0 %v278
        %282 = vmatpush.msra.mxu0 %v277
        %283 = vmatpush.msra.mxu0 %v276
        %284 = vmatpush.msra.mxu0 %v275
        %285 = vmatpush.msra.mxu0 %v274
        %286 = vmatpush.msra.mxu0 %v273
        %287 = vmatpush.msra.mxu0 %v272
        %288 = vmatpush.msra.mxu0 %v271
        %289 = vmatpush.msra.mxu0 %v270
        %290 = vmatpush.msra.mxu0 %v269
        %291 = vmatpush.msra.mxu0 %v268
        %292 = vmatpush.msra.mxu0 %v267
        %293 = vmatpush.msra.mxu0 %v266
        %294 = vmatpush.msra.mxu0 %v265
        %295 = vmatpush.msra.mxu0 %v264
        %296 = vmatmul.f32.gmra.mxu0 %v262
        %v297 = vpop.f32.mrf.mxu0
        %v298 = vadd.f32 0.0, %v297
        %299 = vdwg.mxu0
        %v300 = vmax.f32 %v298, 0.0
        %s301 = scalar_lea.vmem [#allocation6], 256
        %v302 = vld [vmem:[%s301] sm:$0xff]
        %v303 = vld [vmem:[%s301 + $0x8] sm:$0xff]
        %v304 = vld [vmem:[%s301 + $0x10] sm:$0xff]
        %v305 = vld [vmem:[%s301 + $0x18] sm:$0xff]
        %v306 = vld [vmem:[%s301 + $0x20] sm:$0xff]
        %v307 = vld [vmem:[%s301 + $0x28] sm:$0xff]
        %v308 = vld [vmem:[%s301 + $0x30] sm:$0xff]
        %v309 = vld [vmem:[%s301 + $0x38] sm:$0xff]
        %v310 = vld [vmem:[%s301 + $0x40] sm:$0xff]
        %v311 = vld [vmem:[%s301 + $0x48] sm:$0xff]
        %v312 = vld [vmem:[%s301 + $0x50] sm:$0xff]
        %v313 = vld [vmem:[%s301 + $0x58] sm:$0xff]
        %v314 = vld [vmem:[%s301 + $0x60] sm:$0xff]
        %v315 = vld [vmem:[%s301 + $0x68] sm:$0xff]
        %v316 = vld [vmem:[%s301 + $0x70] sm:$0xff]
        %v317 = vld [vmem:[%s301 + $0x78] sm:$0xff]
        %318 = vmatpush.msra.mxu0 %v317
        %319 = vmatpush.msra.mxu0 %v316
        %320 = vmatpush.msra.mxu0 %v315
        %321 = vmatpush.msra.mxu0 %v314
        %322 = vmatpush.msra.mxu0 %v313
        %323 = vmatpush.msra.mxu0 %v312
        %324 = vmatpush.msra.mxu0 %v311
        %325 = vmatpush.msra.mxu0 %v310
        %326 = vmatpush.msra.mxu0 %v309
        %327 = vmatpush.msra.mxu0 %v308
        %328 = vmatpush.msra.mxu0 %v307
        %329 = vmatpush.msra.mxu0 %v306
        %330 = vmatpush.msra.mxu0 %v305
        %331 = vmatpush.msra.mxu0 %v304
        %332 = vmatpush.msra.mxu0 %v303
        %333 = vmatpush.msra.mxu0 %v302
        %334 = vmatmul.f32.gmra.mxu0 %v300
        %v335 = vpop.f32.mrf.mxu0
        %v336 = vadd.f32 0.0, %v335
        %337 = vdwg.mxu0
        %v338 = vmax.f32 %v336, 0.0
        %s339 = scalar_lea.vmem [#allocation6], 384
        %v340 = vld [vmem:[%s339] sm:$0xff]
        %v341 = vld [vmem:[%s339 + $0x8] sm:$0xff]
        %v342 = vld [vmem:[%s339 + $0x10] sm:$0xff]
        %v343 = vld [vmem:[%s339 + $0x18] sm:$0xff]
        %v344 = vld [vmem:[%s339 + $0x20] sm:$0xff]
        %v345 = vld [vmem:[%s339 + $0x28] sm:$0xff]
        %v346 = vld [vmem:[%s339 + $0x30] sm:$0xff]
        %v347 = vld [vmem:[%s339 + $0x38] sm:$0xff]
        %v348 = vld [vmem:[%s339 + $0x40] sm:$0xff]
        %v349 = vld [vmem:[%s339 + $0x48] sm:$0xff]
        %v350 = vld [vmem:[%s339 + $0x50] sm:$0xff]
        %v351 = vld [vmem:[%s339 + $0x58] sm:$0xff]
        %v352 = vld [vmem:[%s339 + $0x60] sm:$0xff]
        %v353 = vld [vmem:[%s339 + $0x68] sm:$0xff]
        %v354 = vld [vmem:[%s339 + $0x70] sm:$0xff]
        %v355 = vld [vmem:[%s339 + $0x78] sm:$0xff]
        %356 = vmatpush.msra.mxu0 %v355
        %357 = vmatpush.msra.mxu0 %v354
        %358 = vmatpush.msra.mxu0 %v353
        %359 = vmatpush.msra.mxu0 %v352
        %360 = vmatpush.msra.mxu0 %v351
        %361 = vmatpush.msra.mxu0 %v350
        %362 = vmatpush.msra.mxu0 %v349
        %363 = vmatpush.msra.mxu0 %v348
        %364 = vmatpush.msra.mxu0 %v347
        %365 = vmatpush.msra.mxu0 %v346
        %366 = vmatpush.msra.mxu0 %v345
        %367 = vmatpush.msra.mxu0 %v344
        %368 = vmatpush.msra.mxu0 %v343
        %369 = vmatpush.msra.mxu0 %v342
        %370 = vmatpush.msra.mxu0 %v341
        %371 = vmatpush.msra.mxu0 %v340
        %372 = vmatmul.f32.gmra.mxu0 %v338
        %v373 = vpop.f32.mrf.mxu0
        %v374 = vadd.f32 0.0, %v373
        %375 = vdwg.mxu0
        %v376 = vmax.f32 %v374, 0.0
        %s377 = scalar_lea.vmem [#allocation6], 512
        %v378 = vld [vmem:[%s377] sm:$0xff]
        %v379 = vld [vmem:[%s377 + $0x8] sm:$0xff]
        %v380 = vld [vmem:[%s377 + $0x10] sm:$0xff]
        %v381 = vld [vmem:[%s377 + $0x18] sm:$0xff]
        %v382 = vld [vmem:[%s377 + $0x20] sm:$0xff]
        %v383 = vld [vmem:[%s377 + $0x28] sm:$0xff]
        %v384 = vld [vmem:[%s377 + $0x30] sm:$0xff]
        %v385 = vld [vmem:[%s377 + $0x38] sm:$0xff]
        %v386 = vld [vmem:[%s377 + $0x40] sm:$0xff]
        %v387 = vld [vmem:[%s377 + $0x48] sm:$0xff]
        %v388 = vld [vmem:[%s377 + $0x50] sm:$0xff]
        %v389 = vld [vmem:[%s377 + $0x58] sm:$0xff]
        %v390 = vld [vmem:[%s377 + $0x60] sm:$0xff]
        %v391 = vld [vmem:[%s377 + $0x68] sm:$0xff]
        %v392 = vld [vmem:[%s377 + $0x70] sm:$0xff]
        %v393 = vld [vmem:[%s377 + $0x78] sm:$0xff]
        %394 = vmatpush.msra.mxu0 %v393
        %395 = vmatpush.msra.mxu0 %v392
        %396 = vmatpush.msra.mxu0 %v391
        %397 = vmatpush.msra.mxu0 %v390
        %398 = vmatpush.msra.mxu0 %v389
        %399 = vmatpush.msra.mxu0 %v388
        %400 = vmatpush.msra.mxu0 %v387
        %401 = vmatpush.msra.mxu0 %v386
        %402 = vmatpush.msra.mxu0 %v385
        %403 = vmatpush.msra.mxu0 %v384
        %404 = vmatpush.msra.mxu0 %v383
        %405 = vmatpush.msra.mxu0 %v382
        %406 = vmatpush.msra.mxu0 %v381
        %407 = vmatpush.msra.mxu0 %v380
        %408 = vmatpush.msra.mxu0 %v379
        %409 = vmatpush.msra.mxu0 %v378
        %410 = vmatmul.f32.gmra.mxu0 %v376
        %v411 = vpop.f32.mrf.mxu0
        %v412 = vadd.f32 0.0, %v411
        %413 = vdwg.mxu0
        %414 = vst.msk [vmem:[%s205] sm:$0xff] %vm223, %v412
        %416 = vrot.lane.b32.xlu0 %v412, 118
        %v417 = vpop.permute.xlu0 %416
        %vm419 = vcmask 39936
        %420 = vst.msk [vmem:[%s215] sm:$0xff] %vm419, %v417
        %s421 = sand.u32 %s77, 1
        %s422 = scalar_lea.sflag [#allocation5], %s421
        %s423 = sand.u32 %s77, 1
        %s424 = smul.addr %s423, 8
        %s425 = scalar_lea.vmem [#allocation8], %s424
        %p426 = scmp.lt.s32.totalorder %s22, 1
        %s427 = scalar_select %p426, %s22, 1
        %s428 = smul.addr %s427, 8
        %s429 = scalar_lea.vmem %s3, %s428
        // Predicated region
        $region37: #{nbeats_trend_forward.1} parent=27 // pred_check
          %p430 = pneg %p87
        $region38: #{nbeats_trend_forward.1} parent=27 // pred_check_branch
          %432 = sbr.rel (%p430) target = $region40
        $region39: #{nbeats_trend_forward.1} parent=27 // pred_region
          %434 = vsyncadd %s422, 0
          %s435 = smul.addr %s22, 8
          %s436 = scalar_lea.hbm %s2, %s435
          %s438 = sshll.u32 %s425, 4
          %s439 = int_to_ptr.vmem [resolvable:$true] %s438
          %s440 = sshll.u32 %s436, 4
          %s441 = int_to_ptr.hbm [resolvable:$true] %s440
          %443 = dma.vmem_to_hbm [thread:$0]  %s439, 128, %s441, %s422
        $region40: #{nbeats_trend_forward.1} parent=27 // pred_fallthru
          _
        // Predicated region
        $region41: #{nbeats_trend_forward.1} parent=27 // pred_check
          %p444 = pneg %p113
        $region42: #{nbeats_trend_forward.1} parent=27 // pred_check_branch
          %446 = sbr.rel (%p444) target = $region44
        $region43: #{nbeats_trend_forward.1} parent=27 // pred_region
          _
        $region44: #{nbeats_trend_forward.1} parent=27 // pred_fallthru
          _
      $region28: #{nbeats_trend_forward.1} parent=5 // pred_fallthru
        _
      %p447 = scmp.le.s32.totalorder 2, %s17
      // Predicated region
      $region45: #{nbeats_trend_forward.1} parent=5 // pred_check
        %p448 = pneg %p447
      $region46: #{nbeats_trend_forward.1} parent=5 // pred_check_branch
        %450 = sbr.rel (%p448) target = $region48
      $region47: #{nbeats_trend_forward.1} parent=5 // pred_region
        %s451 = ssub.s32 %s17, 2
        // Predicated region
        $region49: #{nbeats_trend_forward.1} parent=47 // pred_check
          %p452 = pneg %p93
        $region50: #{nbeats_trend_forward.1} parent=47 // pred_check_branch
          %454 = sbr.rel (%p452) target = $region52
        $region51: #{nbeats_trend_forward.1} parent=47 // pred_region
          %s455 = sand.u32 %s78, 1
          %s456 = scalar_lea.sflag [#allocation5], %s455
          %s457 = sand.u32 %s78, 1
          %s458 = smul.addr %s457, 8
          %s459 = scalar_lea.vmem [#allocation8], %s458
          %461 = dma.done %s456, 128
        $region52: #{nbeats_trend_forward.1} parent=47 // pred_fallthru
          _
        // Predicated region
        $region53: #{nbeats_trend_forward.1} parent=47 // pred_check
          %p462 = pneg %p119
        $region54: #{nbeats_trend_forward.1} parent=47 // pred_check_branch
          %464 = sbr.rel (%p462) target = $region56
        $region55: #{nbeats_trend_forward.1} parent=47 // pred_region
          %p465 = scmp.lt.s32.totalorder %s23, 1
          %s466 = scalar_select %p465, %s23, 1
          %s467 = smul.addr %s466, 8
          %s468 = scalar_lea.vmem %s3, %s467
        $region56: #{nbeats_trend_forward.1} parent=47 // pred_fallthru
          _
      $region48: #{nbeats_trend_forward.1} parent=5 // pred_fallthru
        _
    $region6: #{nbeats_trend_forward.1} parent=1 // loop_footer
      %s21 = sadd.s32 1, %s17
    $region7: #{nbeats_trend_forward.1} parent=1 // loop_footer_branch
      %16 = sbr.rel target = $region3
    $region8: #{nbeats_trend_forward.1} parent=1 // loop_exit
      _
    %469 = vsyncpa [#allocation4], 1
    %s470 = scalar_lea.sflag [#allocation4], 1
    %471 = vsyncpa %s470, 1
    %472 = vsyncpa [#allocation7], 1
    %473 = vsyncpa [#allocation5], 1
    %s474 = scalar_lea.sflag [#allocation5], 1
    %475 = vsyncpa %s474, 1

</llo_original>
